<compile_context>
chip_gen: v7x
topology: tpu7x:2x2x1
jax: 0.10.0
libtpu: 0.0.40
codegen_flags: <defaults>
</compile_context>

<pallas_src>
import jax
import jax.numpy as jnp
from jax.experimental import pallas as pl
from jax.experimental.pallas import tpu as pltpu

_NEG_BIG = -1.0e30  # finite "minus infinity" baked into padded b2 columns


def _round_up(x, m):
    return (x + m - 1) // m * m


def _cbow_mlp_kernel(x_ref, w1_ref, b1_ref, w2_ref, b2_ref, o_ref,
                     h_ref, m_ref, l_ref, lse_ref):
    # x_ref : (TB, K)  f32      w1_ref: (K, H)  f32     b1_ref: (1, H)  f32
    # w2_ref: (H, TV)  bf16     b2_ref: (1, TV) f32     o_ref : (TB, TV) f32
    # scratch: h (TB, H) bf16; running max / running sum / lse: (TB, 1) f32
    p = pl.program_id(1)          # 0: online logsumexp sweep, 1: write sweep
    j = pl.program_id(2)          # vocab tile
    nv = pl.num_programs(2)

    # Layer 1 once per batch tile: h = ReLU(x @ W1 + b1), resident in VMEM.
    @pl.when(jnp.logical_and(p == 0, j == 0))
    def _():
        h = jnp.dot(x_ref[...], w1_ref[...], preferred_element_type=jnp.float32)
        h = jnp.maximum(h + b1_ref[...], 0.0)
        h_ref[...] = h.astype(h_ref.dtype)
        m_ref[...] = jnp.full(m_ref.shape, -jnp.inf, m_ref.dtype)
        l_ref[...] = jnp.zeros(l_ref.shape, l_ref.dtype)

    # Layer 2 logits for this vocab tile (recomputed in pass 1 from resident h).
    # Padded vocab columns already carry b2 = -1e30, so no extra masking needed.
    z = jnp.dot(h_ref[...], w2_ref[...], preferred_element_type=jnp.float32)
    z = z + b2_ref[...]

    @pl.when(p == 0)
    def _():
        # Online (flash-style) logsumexp across vocab tiles.  No o_ref write in
        # this pass: the output block index stays fixed so nothing hits HBM.
        m_prev = m_ref[...]
        m_new = jnp.maximum(m_prev, jnp.max(z, axis=-1, keepdims=True))
        l_ref[...] = (l_ref[...] * jnp.exp(m_prev - m_new)
                      + jnp.sum(jnp.exp(z - m_new), axis=-1, keepdims=True))
        m_ref[...] = m_new

    @pl.when(jnp.logical_and(p == 0, j == nv - 1))
    def _():
        lse_ref[...] = m_ref[...] + jnp.log(l_ref[...])

    @pl.when(p == 1)
    def _():
        o_ref[...] = z - lse_ref[...]


def prepare_cbow_params(emb_table, w1, b1, w2, b2, *, vocab_tile=None):
    """Pad / cast parameters ONCE, outside the per-call forward path."""
    vocab, emb_dim = emb_table.shape
    seq_dim, hidden = w1.shape
    assert w2.shape == (hidden, vocab) and b1.shape == (hidden,) and b2.shape == (vocab,)

    # Vocab (lane) axis padded to a multiple of the vocab tile (>=128); hidden /
    # seq_dim only padded to small sublane multiples and served via full-extent
    # blocks -> no 4x blow-up of the dominant w2 stream.
    TV = int(vocab_tile) if vocab_tile is not None else min(2048, _round_up(vocab, 128))
    K_p = _round_up(seq_dim, 8)
    H_p = _round_up(hidden, 16)
    V_p = _round_up(vocab, TV)

    w1_p = jnp.zeros((K_p, H_p), jnp.float32).at[:seq_dim, :hidden].set(
        w1.astype(jnp.float32))
    b1_p = jnp.zeros((1, H_p), jnp.float32).at[0, :hidden].set(b1.astype(jnp.float32))
    # Dominant HBM stream: w2 in bf16 (matmul accumulates in f32).
    w2_p = jnp.zeros((H_p, V_p), jnp.bfloat16).at[:hidden, :vocab].set(
        w2.astype(jnp.bfloat16))
    # Padded vocab columns get a huge negative bias so they never influence the
    # logsumexp (removes any per-step mask from the kernel).
    b2_p = jnp.full((1, V_p), _NEG_BIG, jnp.float32).at[0, :vocab].set(
        b2.astype(jnp.float32))

    return dict(
        emb=emb_table.astype(jnp.float32), w1=w1_p, b1=b1_p, w2=w2_p, b2=b2_p,
        vocab=int(vocab), emb_dim=int(emb_dim), seq_dim=int(seq_dim),
        hidden=int(hidden), K_p=int(K_p), H_p=int(H_p), V_p=int(V_p), TV=int(TV))


def cbow_forward(seq, params, *, batch_tile=None):
    """seq: (B, context_size) int32 -> (B, vocab) f32 log-probabilities."""
    B, ctx = seq.shape
    seq_dim = params["seq_dim"]
    K_p, H_p, V_p, TV, vocab = (params["K_p"], params["H_p"], params["V_p"],
                                params["TV"], params["vocab"])
    assert ctx * params["emb_dim"] == seq_dim

    # Embedding lookup + flatten (plain-JAX gather glue, kept in f32 for
    # layer-1 accuracy; it is tiny compared to the w2 / output streams).
    # TODO(synk): fuse the gather into the kernel via
    #   PrefetchScalarGridSpec(num_scalar_prefetch=1) + pl.Element row gather
    # to avoid the HBM round trip of the gathered activations.
    x = jnp.take(params["emb"], seq, axis=0).reshape(B, seq_dim)

    # Batch tile: big enough to amortize per-step overhead and w2 re-streams,
    # but keep >= 2 batch tiles when batch allows so v7x's two TensorCores
    # both get work under dimension_semantics=("parallel", ...).
    B_p8 = _round_up(B, 8)
    if batch_tile is None:
        if B_p8 <= 512:
            TB = B_p8 if B_p8 < 256 else _round_up((B_p8 + 1) // 2, 8)
        else:
            TB = 512
    else:
        TB = min(int(batch_tile), B_p8)
    B_p = _round_up(B, TB)

    x_p = jnp.zeros((B_p, K_p), jnp.float32).at[:B, :seq_dim].set(x)

    nb = B_p // TB
    nv = V_p // TV
    grid = (nb, 2, nv)

    # Rough per-core VMEM footprint (double-buffered ins/out + scratch); keep
    # the compiler limit comfortably below v7x's 64 MiB physical VMEM.
    vmem_est = (2 * (TB * K_p * 4 + K_p * H_p * 4 + H_p * 4
                     + H_p * TV * 2 + TV * 4 + TB * TV * 4)
                + TB * H_p * 2 + 3 * TB * 4)
    vmem_limit = int(min(max(2 * vmem_est, 32 * 1024 * 1024), 48 * 1024 * 1024))

    flops = 2 * B_p * K_p * H_p + 2 * (2 * B_p * H_p * V_p)     # layer1 + 2 sweeps of layer2
    bytes_accessed = (B_p * K_p * 4 + K_p * H_p * 4 + H_p * 4
                      + 2 * nb * (H_p * V_p * 2 + V_p * 4)       # w2/b2 per tile per pass
                      + B_p * V_p * 4)                           # output written once

    out = pl.pallas_call(
        _cbow_mlp_kernel,
        out_shape=jax.ShapeDtypeStruct((B_p, V_p), jnp.float32),
        grid_spec=pltpu.PrefetchScalarGridSpec(
            num_scalar_prefetch=0,
            grid=grid,
            in_specs=[
                pl.BlockSpec((TB, K_p), lambda i, p, j: (i, 0)),    # x (per batch tile)
                pl.BlockSpec((K_p, H_p), lambda i, p, j: (0, 0)),   # w1 (full array)
                pl.BlockSpec((1, H_p), lambda i, p, j: (0, 0)),     # b1 (full array)
                pl.BlockSpec((H_p, TV), lambda i, p, j: (0, j)),    # w2 (streamed)
                pl.BlockSpec((1, TV), lambda i, p, j: (0, j)),      # b2 (streamed)
            ],
            # (i, j*p): during pass 0 every step maps to block (i, 0), which is
            # never written in that pass, so no placeholder writeback reaches
            # HBM; pass 1 visits and fully writes each (i, j) block once, and
            # all visits to a block are consecutive.
            out_specs=pl.BlockSpec((TB, TV), lambda i, p, j: (i, j * p)),
            scratch_shapes=[
                pltpu.VMEM((TB, H_p), jnp.bfloat16),  # h = ReLU(x@W1+b1)
                pltpu.VMEM((TB, 1), jnp.float32),     # running max
                pltpu.VMEM((TB, 1), jnp.float32),     # running sum
                pltpu.VMEM((TB, 1), jnp.float32),     # logsumexp
            ],
        ),
        compiler_params=pltpu.CompilerParams(
            dimension_semantics=("parallel", "arbitrary", "arbitrary"),
            vmem_limit_bytes=vmem_limit,
        ),
        cost_estimate=pl.CostEstimate(
            flops=int(flops),
            transcendentals=int(B_p * V_p + B_p),
            bytes_accessed=int(bytes_accessed),
        ),
    )(x_p, params["w1"], params["b1"], params["w2"], params["b2"])

    return out[:B, :vocab]


if __name__ == "__main__":
    # Small shapes consistent with the module's forward.
    vocab_size, emb_dim, hidden, context_size, batch = 32, 16, 32, 4, 8
    seq_dim = context_size * emb_dim

    key = jax.random.PRNGKey(0)
    k_emb, k_w1, k_b1, k_w2, k_b2, k_seq = jax.random.split(key, 6)

    # Deterministic synthetic parameters (weights stored (in, out); x @ W + b
    # is equivalent to PyTorch's x @ W_t.T + b).
    emb_table = jax.random.normal(k_emb, (vocab_size, emb_dim), jnp.float32)
    w1 = jax.random.normal(k_w1, (seq_dim, hidden), jnp.float32) * 0.1
    b1 = jax.random.normal(k_b1, (hidden,), jnp.float32) * 0.1
    w2 = jax.random.normal(k_w2, (hidden, vocab_size), jnp.float32) * 0.1
    b2 = jax.random.normal(k_b2, (vocab_size,), jnp.float32) * 0.1

    seq = jax.random.randint(k_seq, (batch, context_size), 0, vocab_size, jnp.int32)

    params = prepare_cbow_params(emb_table, w1, b1, w2, b2)
    out = cbow_forward(seq, params)
    out = jax.block_until_ready(out)

    assert out.shape == (batch, vocab_size)

    # Log-softmax rows must sum (in prob space) to ~1.
    row_sums = jnp.sum(jnp.exp(out), axis=1)
    assert jnp.allclose(row_sums, 1.0, atol=1e-3), row_sums

    # Check against a plain-JAX f32 reference (kernel streams w2 / h in bf16).
    embs_ref = jnp.take(emb_table, seq, axis=0).reshape(batch, seq_dim)
    h_full = jnp.maximum(embs_ref @ w1 + b1, 0.0)
    z_ref = h_full @ w2 + b2
    ref = jax.nn.log_softmax(z_ref, axis=1)
    assert jnp.allclose(out, ref, atol=5e-2), float(jnp.max(jnp.abs(out - ref)))

    print("KERNEL_OK")
</pallas_src>

<mosaic_0001>
module attributes {stable_mosaic.version = 11 : i64} {
  func.func @_cbow_mlp_kernel(%arg0: i32, %arg1: i32, %arg2: i32, %arg3: memref<8x64xf32, #tpu.memory_space<vmem>>, %arg4: memref<64x32xf32, #tpu.memory_space<vmem>>, %arg5: memref<1x32xf32, #tpu.memory_space<vmem>>, %arg6: memref<32x128xbf16, #tpu.memory_space<vmem>>, %arg7: memref<1x128xf32, #tpu.memory_space<vmem>>, %arg8: memref<8x128xf32, #tpu.memory_space<vmem>>, %arg9: memref<8x32xbf16, #tpu.memory_space<vmem>>, %arg10: memref<8x1xf32, #tpu.memory_space<vmem>>, %arg11: memref<8x1xf32, #tpu.memory_space<vmem>>, %arg12: memref<8x1xf32, #tpu.memory_space<vmem>>) attributes {dimension_semantics = [#tpu.dimension_semantics<parallel>, #tpu.dimension_semantics<arbitrary>, #tpu.dimension_semantics<arbitrary>], iteration_bounds = array<i64: 1, 2, 1>, scalar_prefetch = 0 : i64, scratch_operands = 4 : i64, tpu.core_type = #tpu.core_type<tc>, window_params = [{transform_indices = @transform_0, window_bounds = array<i64: 8, 64>}, {pipeline_mode = #tpu.pipeline_mode<synchronous>, transform_indices = @transform_1, window_bounds = array<i64: 64, 32>}, {pipeline_mode = #tpu.pipeline_mode<synchronous>, transform_indices = @transform_2, window_bounds = array<i64: 1, 32>}, {transform_indices = @transform_3, window_bounds = array<i64: 32, 128>}, {transform_indices = @transform_4, window_bounds = array<i64: 1, 128>}, {transform_indices = @transform_5, window_bounds = array<i64: 8, 128>}]} {
    %c0_i32 = arith.constant 0 : i32
    %0 = arith.cmpi eq, %arg1, %c0_i32 : i32
    %c0_i32_0 = arith.constant 0 : i32
    %1 = arith.cmpi eq, %arg2, %c0_i32_0 : i32
    %2 = arith.andi %0, %1 : i1
    %3 = arith.extui %2 : i1 to i32
    %c0_i32_1 = arith.constant 0 : i32
    %4 = arith.cmpi ne, %3, %c0_i32_1 : i32
    scf.if %4 {
      %c0_13 = arith.constant 0 : index
      %c0_14 = arith.constant 0 : index
      %22 = vector.load %arg3[%c0_13, %c0_14] : memref<8x64xf32, #tpu.memory_space<vmem>>, vector<8x64xf32>
      %c0_15 = arith.constant 0 : index
      %c0_16 = arith.constant 0 : index
      %23 = vector.load %arg4[%c0_15, %c0_16] : memref<64x32xf32, #tpu.memory_space<vmem>>, vector<64x32xf32>
      %cst_17 = arith.constant dense<0.000000e+00> : vector<8x32xf32>
      %24 = tpu.matmul %22, %23, %cst_17 {dimension_numbers = #tpu.dot_dimension_numbers<[1], [0], [0], [1], [0, 0, 1, 1], [], []>} : vector<8x64xf32>, vector<64x32xf32>, vector<8x32xf32> -> vector<8x32xf32>
      %c0_18 = arith.constant 0 : index
      %c0_19 = arith.constant 0 : index
      %25 = vector.load %arg5[%c0_18, %c0_19] : memref<1x32xf32, #tpu.memory_space<vmem>>, vector<1x32xf32>
      %26 = vector.broadcast %25 : vector<1x32xf32> to vector<8x32xf32>
      %27 = arith.addf %24, %26 : vector<8x32xf32>
      %cst_20 = arith.constant 0.000000e+00 : f32
      %28 = vector.broadcast %cst_20 : f32 to vector<8x32xf32>
      %29 = arith.maximumf %27, %28 : vector<8x32xf32>
      %30 = arith.truncf %29 : vector<8x32xf32> to vector<8x32xbf16>
      %c0_21 = arith.constant 0 : index
      %c0_22 = arith.constant 0 : index
      %31 = vector.load %arg9[%c0_21, %c0_22] : memref<8x32xbf16, #tpu.memory_space<vmem>>, vector<8x32xbf16>
      tpu.vector_store %arg9[%c0_21, %c0_22], %30 {strides = array<i32>} : memref<8x32xbf16, #tpu.memory_space<vmem>>, vector<8x32xbf16>,
      %cst_23 = arith.constant 0xFF800000 : f32
      %32 = vector.broadcast %cst_23 : f32 to vector<8x1xf32>
      %c0_24 = arith.constant 0 : index
      %c0_25 = arith.constant 0 : index
      %33 = vector.load %arg10[%c0_24, %c0_25] : memref<8x1xf32, #tpu.memory_space<vmem>>, vector<8x1xf32>
      tpu.vector_store %arg10[%c0_24, %c0_25], %32 {strides = array<i32>} : memref<8x1xf32, #tpu.memory_space<vmem>>, vector<8x1xf32>,
      %cst_26 = arith.constant 0.000000e+00 : f32
      %34 = vector.broadcast %cst_26 : f32 to vector<8x1xf32>
      %c0_27 = arith.constant 0 : index
      %c0_28 = arith.constant 0 : index
      %35 = vector.load %arg11[%c0_27, %c0_28] : memref<8x1xf32, #tpu.memory_space<vmem>>, vector<8x1xf32>
      tpu.vector_store %arg11[%c0_27, %c0_28], %34 {strides = array<i32>} : memref<8x1xf32, #tpu.memory_space<vmem>>, vector<8x1xf32>,
    } else {
    }
    %c0 = arith.constant 0 : index
    %c0_2 = arith.constant 0 : index
    %5 = vector.load %arg9[%c0, %c0_2] : memref<8x32xbf16, #tpu.memory_space<vmem>>, vector<8x32xbf16>
    %c0_3 = arith.constant 0 : index
    %c0_4 = arith.constant 0 : index
    %6 = vector.load %arg6[%c0_3, %c0_4] : memref<32x128xbf16, #tpu.memory_space<vmem>>, vector<32x128xbf16>
    %cst = arith.constant dense<0.000000e+00> : vector<8x128xf32>
    %7 = tpu.matmul %5, %6, %cst {dimension_numbers = #tpu.dot_dimension_numbers<[1], [0], [0], [1], [0, 0, 1, 1], [], []>} : vector<8x32xbf16>, vector<32x128xbf16>, vector<8x128xf32> -> vector<8x128xf32>
    %c0_5 = arith.constant 0 : index
    %c0_6 = arith.constant 0 : index
    %8 = vector.load %arg7[%c0_5, %c0_6] : memref<1x128xf32, #tpu.memory_space<vmem>>, vector<1x128xf32>
    %9 = vector.broadcast %8 : vector<1x128xf32> to vector<8x128xf32>
    %10 = arith.addf %7, %9 : vector<8x128xf32>
    %c0_i32_7 = arith.constant 0 : i32
    %11 = arith.cmpi eq, %arg1, %c0_i32_7 : i32
    %12 = arith.extui %11 : i1 to i32
    %c0_i32_8 = arith.constant 0 : i32
    %13 = arith.cmpi ne, %12, %c0_i32_8 : i32
    scf.if %13 {
      %c0_13 = arith.constant 0 : index
      %c0_14 = arith.constant 0 : index
      %22 = vector.load %arg10[%c0_13, %c0_14] : memref<8x1xf32, #tpu.memory_space<vmem>>, vector<8x1xf32>
      %cst_15 = arith.constant dense<0xFF800000> : vector<8xf32>
      %23 = vector.multi_reduction <maximumf>, %10, %cst_15 [1] : vector<8x128xf32> to vector<8xf32>
      %24 = vector.shape_cast %23 : vector<8xf32> to vector<8x1xf32>
      %25 = arith.maximumf %22, %24 : vector<8x1xf32>
      %c0_16 = arith.constant 0 : index
      %c0_17 = arith.constant 0 : index
      %26 = vector.load %arg11[%c0_16, %c0_17] : memref<8x1xf32, #tpu.memory_space<vmem>>, vector<8x1xf32>
      %27 = arith.subf %22, %25 : vector<8x1xf32>
      %28 = math.exp %27 : vector<8x1xf32>
      %29 = arith.mulf %26, %28 : vector<8x1xf32>
      %30 = vector.broadcast %25 : vector<8x1xf32> to vector<8x128xf32>
      %31 = arith.subf %10, %30 : vector<8x128xf32>
      %32 = math.exp %31 : vector<8x128xf32>
      %cst_18 = arith.constant dense<0.000000e+00> : vector<8xf32>
      %33 = vector.multi_reduction <add>, %32, %cst_18 [1] : vector<8x128xf32> to vector<8xf32>
      %34 = vector.shape_cast %33 : vector<8xf32> to vector<8x1xf32>
      %35 = arith.addf %29, %34 : vector<8x1xf32>
      %c0_19 = arith.constant 0 : index
      %c0_20 = arith.constant 0 : index
      %36 = vector.load %arg11[%c0_19, %c0_20] : memref<8x1xf32, #tpu.memory_space<vmem>>, vector<8x1xf32>
      tpu.vector_store %arg11[%c0_19, %c0_20], %35 {strides = array<i32>} : memref<8x1xf32, #tpu.memory_space<vmem>>, vector<8x1xf32>,
      %c0_21 = arith.constant 0 : index
      %c0_22 = arith.constant 0 : index
      %37 = vector.load %arg10[%c0_21, %c0_22] : memref<8x1xf32, #tpu.memory_space<vmem>>, vector<8x1xf32>
      tpu.vector_store %arg10[%c0_21, %c0_22], %25 {strides = array<i32>} : memref<8x1xf32, #tpu.memory_space<vmem>>, vector<8x1xf32>,
    } else {
    }
    %c0_i32_9 = arith.constant 0 : i32
    %14 = arith.cmpi eq, %arg1, %c0_i32_9 : i32
    %c0_i32_10 = arith.constant 0 : i32
    %15 = arith.cmpi eq, %arg2, %c0_i32_10 : i32
    %16 = arith.andi %14, %15 : i1
    %17 = arith.extui %16 : i1 to i32
    %c0_i32_11 = arith.constant 0 : i32
    %18 = arith.cmpi ne, %17, %c0_i32_11 : i32
    scf.if %18 {
      %c0_13 = arith.constant 0 : index
      %c0_14 = arith.constant 0 : index
      %22 = vector.load %arg10[%c0_13, %c0_14] : memref<8x1xf32, #tpu.memory_space<vmem>>, vector<8x1xf32>
      %c0_15 = arith.constant 0 : index
      %c0_16 = arith.constant 0 : index
      %23 = vector.load %arg11[%c0_15, %c0_16] : memref<8x1xf32, #tpu.memory_space<vmem>>, vector<8x1xf32>
      %24 = math.log %23 : vector<8x1xf32>
      %25 = arith.addf %22, %24 : vector<8x1xf32>
      %c0_17 = arith.constant 0 : index
      %c0_18 = arith.constant 0 : index
      %26 = vector.load %arg12[%c0_17, %c0_18] : memref<8x1xf32, #tpu.memory_space<vmem>>, vector<8x1xf32>
      tpu.vector_store %arg12[%c0_17, %c0_18], %25 {strides = array<i32>} : memref<8x1xf32, #tpu.memory_space<vmem>>, vector<8x1xf32>,
    } else {
    }
    %c1_i32 = arith.constant 1 : i32
    %19 = arith.cmpi eq, %arg1, %c1_i32 : i32
    %20 = arith.extui %19 : i1 to i32
    %c0_i32_12 = arith.constant 0 : i32
    %21 = arith.cmpi ne, %20, %c0_i32_12 : i32
    scf.if %21 {
      %c0_13 = arith.constant 0 : index
      %c0_14 = arith.constant 0 : index
      %22 = vector.load %arg12[%c0_13, %c0_14] : memref<8x1xf32, #tpu.memory_space<vmem>>, vector<8x1xf32>
      %23 = vector.broadcast %22 : vector<8x1xf32> to vector<8x128xf32>
      %24 = arith.subf %10, %23 : vector<8x128xf32>
      %c0_15 = arith.constant 0 : index
      %c0_16 = arith.constant 0 : index
      %25 = vector.load %arg8[%c0_15, %c0_16] : memref<8x128xf32, #tpu.memory_space<vmem>>, vector<8x128xf32>
      tpu.vector_store %arg8[%c0_15, %c0_16], %24 {strides = array<i32>} : memref<8x128xf32, #tpu.memory_space<vmem>>, vector<8x128xf32>,
    } else {
    }
    return
  }
  func.func @transform_0(%arg0: i32, %arg1: i32, %arg2: i32) -> (i32, i32) {
    %c0_i32 = arith.constant 0 : i32
    %c0_i32_0 = arith.constant 0 : i32
    return %arg0, %c0_i32 : i32, i32
  }
  func.func @transform_1(%arg0: i32, %arg1: i32, %arg2: i32) -> (i32, i32) {
    %c0_i32 = arith.constant 0 : i32
    %c0_i32_0 = arith.constant 0 : i32
    %c0_i32_1 = arith.constant 0 : i32
    return %c0_i32, %c0_i32_0 : i32, i32
  }
  func.func @transform_2(%arg0: i32, %arg1: i32, %arg2: i32) -> (i32, i32) {
    %c0_i32 = arith.constant 0 : i32
    %c0_i32_0 = arith.constant 0 : i32
    %c0_i32_1 = arith.constant 0 : i32
    return %c0_i32, %c0_i32_0 : i32, i32
  }
  func.func @transform_3(%arg0: i32, %arg1: i32, %arg2: i32) -> (i32, i32) {
    %c0_i32 = arith.constant 0 : i32
    %c0_i32_0 = arith.constant 0 : i32
    return %c0_i32, %arg2 : i32, i32
  }
  func.func @transform_4(%arg0: i32, %arg1: i32, %arg2: i32) -> (i32, i32) {
    %c0_i32 = arith.constant 0 : i32
    %c0_i32_0 = arith.constant 0 : i32
    return %c0_i32, %arg2 : i32, i32
  }
  func.func @transform_5(%arg0: i32, %arg1: i32, %arg2: i32) -> (i32, i32) {
    %0 = arith.muli %arg2, %arg1 : i32
    %c0_i32 = arith.constant 0 : i32
    return %arg0, %0 : i32, i32
  }
}

</mosaic_0001>

<llo_original>
// kernel: tpu_custom_call.1
$region0: #{tpu_custom_call.1}
  #allocation0 [shape = 'u32[]', space=smem, size = 0x4, offset = 0x4, fixed_abs, tag = 'smem constant byte address 0x4 - core index']
  #allocation1 [shape = 'u32[144,128]{1,0:T(1,128)}', space=vmem, size = 0x12000, scoped, tag = 'internal scratch']
  #allocation2 [shape = 'bf16[8,32]{1,0:T(8,128)(2,1)}', space=vmem, size = 0x800, scoped, tag = 'scratch operand']
  #allocation3 [shape = 'f32[8,1]{1,0:T(8,128)}', space=vmem, size = 0x1000, scoped, tag = 'scratch operand']
  #allocation4 [shape = 'f32[8,1]{1,0:T(8,128)}', space=vmem, size = 0x1000, scoped, tag = 'scratch operand']
  #allocation5 [shape = 'f32[8,1]{1,0:T(8,128)}', space=vmem, size = 0x1000, scoped, tag = 'scratch operand']
  %s0 = inlined_call_operand.vmem [shape: f32[8,64], index: 0, kind: input, shape index: {}]
  %s1 = inlined_call_operand.vmem [shape: f32[64,32], index: 1, kind: input, shape index: {}]
  %s2 = inlined_call_operand.vmem [shape: f32[1,32], index: 2, kind: input, shape index: {}]
  %s3 = inlined_call_operand.vmem [shape: bf16[32,128], index: 3, kind: input, shape index: {}]
  %s4 = inlined_call_operand.vmem [shape: f32[1,128], index: 4, kind: input, shape index: {}]
  %s5 = inlined_call_operand.hbm [shape: f32[8,128], index: 5, kind: output, shape index: {}]
  %s6 = sld [smem:[#allocation0]]
  $region69: #{tpu_custom_call.1} parent=0
    _
  %s8 = ssub.s32 1, %s6
  %s9 = scalar_select 0, %s8, %s6
  $region1: #{tpu_custom_call.1} parent=0
    #allocation6 [shape = 'u8[8192]{0}', space=vmem, size = 0x2000, scoped, tag = 'output window, operand 0']
    #allocation7 [shape = 's32[2]{0}', space=sflag, size = 0x8, scoped, tag = 'scoped memory for tpu_custom_call.1']
    %10 = vsyncpa [#allocation7], 0
    %s11 = scalar_lea.sflag [#allocation7], 1
    %12 = vsyncpa %s11, 0
    loop: start=0, step=1, limit=4
    $region2: #{tpu_custom_call.1} parent=1 // loop_pre_header
      _
    $region3: #{tpu_custom_call.1} parent=1 // loop_header
      %s14 = sphi 0, %s18
      %p15 = scmp.ge.s32.totalorder %s14, 4
      %s21 = sphi 0, %s40
      %s22 = sphi 0, %s36
      %s23 = sphi 0, %s32
      %s24 = sphi 0, %s21
      %s25 = sphi 0, %s22
      %s26 = sphi 0, %s23
      %s27 = sphi 0, %s24
      %s28 = sphi 0, %s25
      %s29 = sphi 0, %s26
      %s43 = sphi 0, %s45
      %s46 = sphi 0, %s43
      %s47 = sphi 0, %s46
      %s63 = sphi 0, %s47
      %s67 = sphi 0, %s67
      %s69 = sphi 0, %s67
      %s70 = sphi 0, %s69
      %s84 = sphi 0, %s70
      %s88 = sphi 0, %s88
      %s90 = sphi 0, %s88
      %s91 = sphi 0, %s90
      %s105 = sphi 0, %s91
      %s111 = sphi 0, %s113
      %s114 = sphi 0, %s111
      %s115 = sphi 0, %s114
      %s131 = sphi 0, %s115
      %s137 = sphi 0, %s139
      %s140 = sphi 0, %s137
      %s141 = sphi 0, %s140
      %s157 = sphi 0, %s141
      %s167 = sphi 0, %s169
      %s170 = sphi 0, %s167
      %s171 = sphi 0, %s170
      %s187 = sphi 0, %s171
    $region4: #{tpu_custom_call.1} parent=1 // loop_header_branch
      %17 = sbr.rel (%p15) target = $region8
    $region5: #{tpu_custom_call.1} parent=1 // loop_body
      %s19 = ssub.s32 %s14, 1
      %s20 = ssub.s32 %s14, 2
      %s30 = sadd.s32 1, %s23
      %p31 = scmp.ge.s32.totalorder %s30, 1
      %s32 = scalar_select %p31, 0, %s30
      %s33 = sadd.s32 1, %s22
      %s34 = scalar_select %p31, %s33, %s22
      %p35 = scmp.ge.s32.totalorder %s34, 2
      %s36 = scalar_select %p35, 0, %s34
      %s37 = sadd.s32 1, %s21
      %s38 = scalar_select %p35, %s37, %s21
      %p39 = scmp.ge.s32.totalorder %s38, 1
      %s40 = scalar_select %p39, 0, %s38
      %s41 = ssub.s32 %s21, %s40
      %p42 = scmp.eq.s32.totalorder %s41, 0
      %s44 = sadd.s32 %s43, 1
      %s45 = scalar_select %p42, %s43, %s44
      %p48 = pneg %p42
      %p49 = scmp.eq.s32.totalorder %s14, 1
      %p50 = por %p48, %p49
      %p51 = scmp.ne.s32.totalorder %s43, %s46
      %p52 = scmp.eq.s32.totalorder %s14, 0
      %p53 = por %p51, %p52
      %p54 = scmp.ne.s32.totalorder %s43, %s46
      %p55 = scmp.eq.s32.totalorder %s19, 1
      %p56 = por %p54, %p55
      %p57 = scmp.ne.s32.totalorder %s46, %s47
      %p58 = scmp.eq.s32.totalorder %s19, 0
      %p59 = por %p57, %p58
      %p60 = scmp.ne.s32.totalorder %s46, %s47
      %p61 = scmp.eq.s32.totalorder %s20, 1
      %p62 = por %p60, %p61
      %p64 = scmp.ne.s32.totalorder %s47, %s63
      %p65 = scmp.eq.s32.totalorder %s20, 0
      %p66 = por %p64, %p65
      %s68 = sadd.s32 %s67, 1
      %p71 = scmp.eq.s32.totalorder %s14, 1
      %p72 = scmp.ne.s32.totalorder %s67, %s69
      %p73 = scmp.eq.s32.totalorder %s14, 0
      %p74 = por %p72, %p73
      %p75 = scmp.ne.s32.totalorder %s67, %s69
      %p76 = scmp.eq.s32.totalorder %s19, 1
      %p77 = por %p75, %p76
      %p78 = scmp.ne.s32.totalorder %s69, %s70
      %p79 = scmp.eq.s32.totalorder %s19, 0
      %p80 = por %p78, %p79
      %p81 = scmp.ne.s32.totalorder %s69, %s70
      %p82 = scmp.eq.s32.totalorder %s20, 1
      %p83 = por %p81, %p82
      %p85 = scmp.ne.s32.totalorder %s70, %s84
      %p86 = scmp.eq.s32.totalorder %s20, 0
      %p87 = por %p85, %p86
      %s89 = sadd.s32 %s88, 1
      %p92 = scmp.eq.s32.totalorder %s14, 1
      %p93 = scmp.ne.s32.totalorder %s88, %s90
      %p94 = scmp.eq.s32.totalorder %s14, 0
      %p95 = por %p93, %p94
      %p96 = scmp.ne.s32.totalorder %s88, %s90
      %p97 = scmp.eq.s32.totalorder %s19, 1
      %p98 = por %p96, %p97
      %p99 = scmp.ne.s32.totalorder %s90, %s91
      %p100 = scmp.eq.s32.totalorder %s19, 0
      %p101 = por %p99, %p100
      %p102 = scmp.ne.s32.totalorder %s90, %s91
      %p103 = scmp.eq.s32.totalorder %s20, 1
      %p104 = por %p102, %p103
      %p106 = scmp.ne.s32.totalorder %s91, %s105
      %p107 = scmp.eq.s32.totalorder %s20, 0
      %p108 = por %p106, %p107
      %s109 = ssub.s32 %s23, %s32
      %p110 = scmp.eq.s32.totalorder %s109, 0
      %s112 = sadd.s32 %s111, 1
      %s113 = scalar_select %p110, %s111, %s112
      %p116 = pneg %p110
      %p117 = scmp.eq.s32.totalorder %s14, 1
      %p118 = por %p116, %p117
      %p119 = scmp.ne.s32.totalorder %s111, %s114
      %p120 = scmp.eq.s32.totalorder %s14, 0
      %p121 = por %p119, %p120
      %p122 = scmp.ne.s32.totalorder %s111, %s114
      %p123 = scmp.eq.s32.totalorder %s19, 1
      %p124 = por %p122, %p123
      %p125 = scmp.ne.s32.totalorder %s114, %s115
      %p126 = scmp.eq.s32.totalorder %s19, 0
      %p127 = por %p125, %p126
      %p128 = scmp.ne.s32.totalorder %s114, %s115
      %p129 = scmp.eq.s32.totalorder %s20, 1
      %p130 = por %p128, %p129
      %p132 = scmp.ne.s32.totalorder %s115, %s131
      %p133 = scmp.eq.s32.totalorder %s20, 0
      %p134 = por %p132, %p133
      %s135 = ssub.s32 %s23, %s32
      %p136 = scmp.eq.s32.totalorder %s135, 0
      %s138 = sadd.s32 %s137, 1
      %s139 = scalar_select %p136, %s137, %s138
      %p142 = pneg %p136
      %p143 = scmp.eq.s32.totalorder %s14, 1
      %p144 = por %p142, %p143
      %p145 = scmp.ne.s32.totalorder %s137, %s140
      %p146 = scmp.eq.s32.totalorder %s14, 0
      %p147 = por %p145, %p146
      %p148 = scmp.ne.s32.totalorder %s137, %s140
      %p149 = scmp.eq.s32.totalorder %s19, 1
      %p150 = por %p148, %p149
      %p151 = scmp.ne.s32.totalorder %s140, %s141
      %p152 = scmp.eq.s32.totalorder %s19, 0
      %p153 = por %p151, %p152
      %p154 = scmp.ne.s32.totalorder %s140, %s141
      %p155 = scmp.eq.s32.totalorder %s20, 1
      %p156 = por %p154, %p155
      %p158 = scmp.ne.s32.totalorder %s141, %s157
      %p159 = scmp.eq.s32.totalorder %s20, 0
      %p160 = por %p158, %p159
      %s161 = smul.u32 %s23, %s22
      %s162 = smul.u32 %s32, %s36
      %s163 = ssub.s32 %s21, %s40
      %s164 = ssub.s32 %s161, %s162
      %s165 = sor.u32 %s163, %s164
      %p166 = scmp.eq.s32.totalorder %s165, 0
      %s168 = sadd.s32 %s167, 1
      %s169 = scalar_select %p166, %s167, %s168
      %p172 = pneg %p166
      %p173 = scmp.eq.s32.totalorder %s14, 1
      %p174 = por %p172, %p173
      %p175 = scmp.ne.s32.totalorder %s167, %s170
      %p176 = scmp.eq.s32.totalorder %s14, 0
      %p177 = por %p175, %p176
      %p178 = scmp.ne.s32.totalorder %s167, %s170
      %p179 = scmp.eq.s32.totalorder %s19, 1
      %p180 = por %p178, %p179
      %p181 = scmp.ne.s32.totalorder %s170, %s171
      %p182 = scmp.eq.s32.totalorder %s19, 0
      %p183 = por %p181, %p182
      %p184 = scmp.ne.s32.totalorder %s170, %s171
      %p185 = scmp.eq.s32.totalorder %s20, 1
      %p186 = por %p184, %p185
      %p188 = scmp.ne.s32.totalorder %s171, %s187
      %p189 = scmp.eq.s32.totalorder %s20, 0
      %p190 = por %p188, %p189
      %p191 = scmp.le.s32.totalorder 1, %s14
      %p192 = scmp.lt.s32.totalorder %s14, 3
      %p193 = pnand %p191, %p192
      %p194 = pneg %p193
      // Predicated region
      $region9: #{tpu_custom_call.1} parent=5 // pred_check
        _
      $region10: #{tpu_custom_call.1} parent=5 // pred_check_branch
        %196 = sbr.rel (%p193) target = $region12
      $region11: #{tpu_custom_call.1} parent=5 // pred_region
        %s197 = ssub.s32 %s14, 1
        // Predicated region
        $region13: #{tpu_custom_call.1} parent=11 // pred_check
          %p198 = pneg %p59
        $region14: #{tpu_custom_call.1} parent=11 // pred_check_branch
          %200 = sbr.rel (%p198) target = $region16
        $region15: #{tpu_custom_call.1} parent=11 // pred_region
          %p201 = scmp.lt.s32.totalorder %s24, 0
          %s202 = scalar_select %p201, %s24, 0
          %s203 = smul.addr %s202, 8
          %s204 = scalar_lea.vmem %s0, %s203
        $region16: #{tpu_custom_call.1} parent=11 // pred_fallthru
          _
        // Predicated region
        $region17: #{tpu_custom_call.1} parent=11 // pred_check
          %p205 = pneg %p80
        $region18: #{tpu_custom_call.1} parent=11 // pred_check_branch
          %207 = sbr.rel (%p205) target = $region20
        $region19: #{tpu_custom_call.1} parent=11 // pred_region
          _
        $region20: #{tpu_custom_call.1} parent=11 // pred_fallthru
          _
        // Predicated region
        $region21: #{tpu_custom_call.1} parent=11 // pred_check
          %p208 = pneg %p101
        $region22: #{tpu_custom_call.1} parent=11 // pred_check_branch
          %210 = sbr.rel (%p208) target = $region24
        $region23: #{tpu_custom_call.1} parent=11 // pred_region
          _
        $region24: #{tpu_custom_call.1} parent=11 // pred_fallthru
          _
        // Predicated region
        $region25: #{tpu_custom_call.1} parent=11 // pred_check
          %p211 = pneg %p127
        $region26: #{tpu_custom_call.1} parent=11 // pred_check_branch
          %213 = sbr.rel (%p211) target = $region28
        $region27: #{tpu_custom_call.1} parent=11 // pred_region
          %p214 = scmp.lt.s32.totalorder %s26, 0
          %s215 = scalar_select %p214, %s26, 0
          %s216 = smul.addr %s215, 4
          %s217 = scalar_lea.vmem %s3, %s216
        $region28: #{tpu_custom_call.1} parent=11 // pred_fallthru
          _
        // Predicated region
        $region29: #{tpu_custom_call.1} parent=11 // pred_check
          %p218 = pneg %p153
        $region30: #{tpu_custom_call.1} parent=11 // pred_check_branch
          %220 = sbr.rel (%p218) target = $region32
        $region31: #{tpu_custom_call.1} parent=11 // pred_region
          %p221 = scmp.lt.s32.totalorder %s26, 0
          %s222 = scalar_select %p221, %s26, 0
          %s223 = scalar_lea.vmem %s4, %s222
        $region32: #{tpu_custom_call.1} parent=11 // pred_fallthru
          _
      $region12: #{tpu_custom_call.1} parent=5 // pred_fallthru
        _
      %p224 = scmp.lt.s32.totalorder %s14, 2
      // Predicated region
      $region33: #{tpu_custom_call.1} parent=5 // pred_check
        %p225 = pneg %p224
      $region34: #{tpu_custom_call.1} parent=5 // pred_check_branch
        %227 = sbr.rel (%p225) target = $region36
      $region35: #{tpu_custom_call.1} parent=5 // pred_region
        _
      $region36: #{tpu_custom_call.1} parent=5 // pred_fallthru
        _
      %p228 = scmp.le.s32.totalorder 1, %s14
      %p229 = scmp.lt.s32.totalorder %s14, 3
      %p230 = pnand %p228, %p229
      %p231 = pneg %p230
      // Predicated region
      $region37: #{tpu_custom_call.1} parent=5 // pred_check
        _
      $region38: #{tpu_custom_call.1} parent=5 // pred_check_branch
        %233 = sbr.rel (%p230) target = $region40
      $region39: #{tpu_custom_call.1} parent=5 // pred_region
        %s234 = ssub.s32 %s14, 1
        %p235 = scmp.lt.s32.totalorder %s24, 0
        %s236 = scalar_select %p235, %s24, 0
        %s237 = smul.addr %s236, 8
        %s238 = scalar_lea.vmem %s0, %s237
        %p239 = pneg %p59
        %p240 = pneg %p56
        %p241 = pneg %p80
        %p242 = pneg %p77
        %p243 = pneg %p101
        %p244 = pneg %p98
        %p245 = scmp.lt.s32.totalorder %s26, 0
        %s246 = scalar_select %p245, %s26, 0
        %s247 = smul.addr %s246, 4
        %s248 = scalar_lea.vmem %s3, %s247
        %p249 = pneg %p127
        %p250 = pneg %p124
        %p251 = scmp.lt.s32.totalorder %s26, 0
        %s252 = scalar_select %p251, %s26, 0
        %s253 = scalar_lea.vmem %s4, %s252
        %p254 = pneg %p153
        %p255 = pneg %p150
        %p256 = pneg %p183
        %p257 = pneg %p180
        %s258 = sand.u32 %s170, 1
        %s259 = scalar_lea.sflag [#allocation7], %s258
        %s260 = sand.u32 %s170, 1
        %s261 = smul.addr %s260, 8
        %s262 = scalar_lea.vmem [#allocation6], %s261
        %p263 = scmp.lt.s32.totalorder %s24, 0
        %s264 = scalar_select %p263, %s24, 0
        %s265 = smul.addr %s264, 8
        %s266 = scalar_lea.vmem %s0, %s265
        %p267 = scmp.lt.s32.totalorder %s26, 0
        %s268 = scalar_select %p267, %s26, 0
        %s269 = smul.addr %s268, 4
        %s270 = scalar_lea.vmem %s3, %s269
        %p271 = scmp.lt.s32.totalorder %s26, 0
        %s272 = scalar_select %p271, %s26, 0
        %s273 = scalar_lea.vmem %s4, %s272
        %s274 = smul.u32 %s26, %s25
        %p276 = scmp.eq.s32.totalorder %s25, 0
        %p277 = scmp.eq.s32.totalorder %s26, 0
        %p278 = pnand %p276, %p277
        %p279 = pneg %p278
        // Predicated region
        $region41: #{tpu_custom_call.1} parent=39 // pred_check
          _
        $region42: #{tpu_custom_call.1} parent=39 // pred_check_branch
          %281 = sbr.rel (%p278) target = $region44
        $region43: #{tpu_custom_call.1} parent=39 // pred_region
          %v282 = vld [vmem:[%s266] sm:$0xff]
          %v283 = vld [vmem:[%s1] sm:$0xff]
          %v284 = vld [vmem:[%s1 + $0x8] sm:$0xff]
          %v285 = vld [vmem:[%s1 + $0x10] sm:$0xff]
          %v286 = vld [vmem:[%s1 + $0x18] sm:$0xff]
          %v287 = vld [vmem:[%s1 + $0x20] sm:$0xff]
          %v288 = vld [vmem:[%s1 + $0x28] sm:$0xff]
          %v289 = vld [vmem:[%s1 + $0x30] sm:$0xff]
          %v290 = vld [vmem:[%s1 + $0x38] sm:$0xff]
          %v291 = vld [vmem:[%s2] sm:$0x1]
          %v293 = vlaneseq
          %v294 = vshrl.u32 %v293, 7
          %v295 = vsub.s32 0, %v294
          %v296 = vrot.slane %v291, %v295
          %vm298 = vcmask 523264
          %v300 = vsel %vm298, %v282, 0
          %302 = vmatprep.subr.mxu0 0.0
          %303 = vmatpush1.msra.mxu0 %v283
          %304 = vmatprep.subr.mxu0 0.0
          %305 = vmatpush1.msra.mxu0 %v284
          %306 = vmatprep.subr.mxu0 0.0
          %307 = vmatpush1.msra.mxu0 %v285
          %308 = vmatprep.subr.mxu0 0.0
          %309 = vmatpush1.msra.mxu0 %v286
          %310 = vmatprep.subr.mxu0 0.0
          %311 = vmatpush1.msra.mxu0 %v287
          %312 = vmatprep.subr.mxu0 0.0
          %313 = vmatpush1.msra.mxu0 %v288
          %314 = vmatprep.subr.mxu0 0.0
          %315 = vmatpush1.msra.mxu0 %v289
          %316 = vmatprep.subr.mxu0 0.0
          %317 = vmatpush1.msra.mxu0 %v290
          %318 = vmatprep.subr.mxu0 0.0
          %319 = vmatpush1.msra.mxu0 0.0
          %320 = vmatprep.subr.mxu0 0.0
          %321 = vmatpush1.msra.mxu0 0.0
          %322 = vmatprep.subr.mxu0 0.0
          %323 = vmatpush1.msra.mxu0 0.0
          %324 = vmatprep.subr.mxu0 0.0
          %325 = vmatpush1.msra.mxu0 0.0
          %326 = vmatprep.subr.mxu0 0.0
          %327 = vmatpush1.msra.mxu0 0.0
          %328 = vmatprep.subr.mxu0 0.0
          %329 = vmatpush1.msra.mxu0 0.0
          %330 = vmatprep.subr.mxu0 0.0
          %331 = vmatpush1.msra.mxu0 0.0
          %332 = vmatprep.subr.mxu0 0.0
          %333 = vmatpush1.msra.mxu0 0.0
          %334 = vmatprep.subr.mxu0 0.0
          %335 = vmatpush1.msra.mxu0 0.0
          %336 = vmatprep.subr.mxu0 0.0
          %337 = vmatpush1.msra.mxu0 0.0
          %338 = vmatprep.subr.mxu0 0.0
          %339 = vmatpush1.msra.mxu0 0.0
          %340 = vmatprep.subr.mxu0 0.0
          %341 = vmatpush1.msra.mxu0 0.0
          %342 = vmatprep.subr.mxu0 0.0
          %343 = vmatpush1.msra.mxu0 0.0
          %344 = vmatprep.subr.mxu0 0.0
          %345 = vmatpush1.msra.mxu0 0.0
          %346 = vmatprep.subr.mxu0 0.0
          %347 = vmatpush1.msra.mxu0 0.0
          %348 = vmatprep.subr.mxu0 0.0
          %349 = vmatpush1.msra.mxu0 0.0
          %350 = vmatprep.subr.mxu0 0.0
          %351 = vmatpush1.msra.mxu0 0.0
          %352 = vmatprep.subr.mxu0 0.0
          %353 = vmatpush1.msra.mxu0 0.0
          %354 = vmatprep.subr.mxu0 0.0
          %355 = vmatpush1.msra.mxu0 0.0
          %356 = vmatprep.subr.mxu0 0.0
          %357 = vmatpush1.msra.mxu0 0.0
          %358 = vmatprep.subr.mxu0 0.0
          %359 = vmatpush1.msra.mxu0 0.0
          %360 = vmatprep.subr.mxu0 0.0
          %361 = vmatpush1.msra.mxu0 0.0
          %362 = vmatprep.subr.mxu0 0.0
          %363 = vmatpush1.msra.mxu0 0.0
          %364 = vmatprep.subr.mxu0 0.0
          %365 = vmatpush1.msra.mxu0 0.0
          %366 = vmatprep.mubr.f32.mxu0 0.0
          %367 = vmatmul.mubr.f32.gmra.mrb[0].mxu0 %v300
          %v368 = vpop.f32.mrb[0].mxu0
          %v369 = vadd.f32 %v296, %v368
          %v370 = vpop.f32.mrb[0].mxu0
          %371 = vdwg.mxu0
          %v372 = vmax.f32 %v369, 0.0
          %v373 = vpack.c.bf16 %v372, %v372
          %vm374 = vcmask 257024
          %375 = vst.msk [vmem:[#allocation2] sm:$0xf] %vm374, %v373
          %vm376 = vcmask 7168
          %377 = vst.msk [vmem:[#allocation3] sm:$0xff] %vm376, -inf
          %378 = vst.msk [vmem:[#allocation4] sm:$0xff] %vm376, 0.0
        $region44: #{tpu_custom_call.1} parent=39 // pred_fallthru
          _
        %v379 = vld [vmem:[#allocation2] sm:$0xf]
        %v380 = vld [vmem:[%s270] sm:$0xf]
        %v381 = vld [vmem:[%s270 + $0x4] sm:$0xf]
        %v382 = vld [vmem:[%s270 + $0x8] sm:$0xf]
        %v383 = vld [vmem:[%s270 + $0xc] sm:$0xf]
        %v384 = vld [vmem:[%s273] sm:$0x1]
        %v386 = vlaneseq
        %v387 = vshrl.u32 %v386, 7
        %v388 = vsub.s32 0, %v387
        %v389 = vrot.slane %v384, %v388
        %v395 = vunpack.c.l.b16 %v380
        %v396 = vunpack.c.l.b16 %v381
        %v397 = vunpack.c.l.b16 %v382
        %v398 = vunpack.c.l.b16 %v383
        %v399 = vpack.c.b16 %v396, %v395
        %v400 = vpack.c.b16 %v398, %v397
        %vm403 = vcmask 261120
        %v405 = vsel %vm403, %v379, 0
        %407 = vmatprep.subr.bf16.mxu0 0
        %408 = vmatpush1.bf16.msra.mxu0 %v399
        %409 = vmatprep.subr.bf16.mxu0 0
        %410 = vmatpush1.bf16.msra.mxu0 %v400
        %411 = vmatprep.subr.bf16.mxu0 0
        %412 = vmatpush1.bf16.msra.mxu0 0
        %413 = vmatprep.subr.bf16.mxu0 0
        %414 = vmatpush1.bf16.msra.mxu0 0
        %415 = vmatprep.subr.bf16.mxu0 0
        %416 = vmatpush1.bf16.msra.mxu0 0
        %417 = vmatprep.subr.bf16.mxu0 0
        %418 = vmatpush1.bf16.msra.mxu0 0
        %419 = vmatprep.subr.bf16.mxu0 0
        %420 = vmatpush1.bf16.msra.mxu0 0
        %421 = vmatprep.subr.bf16.mxu0 0
        %422 = vmatpush1.bf16.msra.mxu0 0
        %423 = vmatprep.subr.bf16.mxu0 0
        %424 = vmatpush1.bf16.msra.mxu0 0
        %425 = vmatprep.subr.bf16.mxu0 0
        %426 = vmatpush1.bf16.msra.mxu0 0
        %427 = vmatprep.subr.bf16.mxu0 0
        %428 = vmatpush1.bf16.msra.mxu0 0
        %429 = vmatprep.subr.bf16.mxu0 0
        %430 = vmatpush1.bf16.msra.mxu0 0
        %431 = vmatprep.subr.bf16.mxu0 0
        %432 = vmatpush1.bf16.msra.mxu0 0
        %433 = vmatprep.subr.bf16.mxu0 0
        %434 = vmatpush1.bf16.msra.mxu0 0
        %435 = vmatprep.subr.bf16.mxu0 0
        %436 = vmatpush1.bf16.msra.mxu0 0
        %437 = vmatprep.subr.bf16.mxu0 0
        %438 = vmatpush1.bf16.msra.mxu0 0
        %439 = vmatprep.mubr.bf16.mxu0 0
        %440 = vmatmul.mubr.bf16.gmra.mrb[0].mxu0 %v405
        %v441 = vpop.f32.mrb[0].mxu0
        %v442 = vadd.f32 %v389, %v441
        %v443 = vpop.f32.mrb[0].mxu0
        %v444 = vpop.f32.mrb[0].mxu0
        %v445 = vpop.f32.mrb[0].mxu0
        %446 = vdwg.mxu0
        // Predicated region
        $region45: #{tpu_custom_call.1} parent=39 // pred_check
          %p447 = pneg %p276
        $region46: #{tpu_custom_call.1} parent=39 // pred_check_branch
          %449 = sbr.rel (%p447) target = $region48
        $region47: #{tpu_custom_call.1} parent=39 // pred_region
          %v450 = vld [vmem:[#allocation3] sm:$0xff]
          %451 = vmax.xlane.f32.xlu0 %v442
          %v452 = vpop.xlane.xlu0 %451
          %v453 = vmax.f32 %v450, %v452
          %v454 = vld [vmem:[#allocation4] sm:$0xff]
          %v455 = vsub.f32 %v450, %v453
          %v456 = vmul.f32 %v455, 1.442695
          %v457 = vpow.pop %v456
          %v458 = vmul.f32 %v454, %v457
          %460 = vset.pattern.permute.xlu0 0
          %461 = vperm.xlu0 %460, %v453
          %v462 = vpop.permute.xlu0 %461
          %v464 = vsub.f32 %v442, %v462
          %v465 = vmul.f32 %v464, 1.442695
          %v466 = vpow.pop %v465
          %467 = vadd.xlane.f32.xlu0 %v466
          %v468 = vpop.xlane.xlu0 %467
          %v469 = vadd.f32 %v458, %v468
          %vm470 = vcmask 7168
          %471 = vst.msk [vmem:[#allocation4] sm:$0xff] %vm470, %v469
          %472 = vst.msk [vmem:[#allocation3] sm:$0xff] %vm470, %v453
        $region48: #{tpu_custom_call.1} parent=39 // pred_fallthru
          _
        // Predicated region
        $region49: #{tpu_custom_call.1} parent=39 // pred_check
          _
        $region50: #{tpu_custom_call.1} parent=39 // pred_check_branch
          %474 = sbr.rel (%p278) target = $region52
        $region51: #{tpu_custom_call.1} parent=39 // pred_region
          %v475 = vld [vmem:[#allocation3] sm:$0xff]
          %v476 = vld [vmem:[#allocation4] sm:$0xff]
          %v477 = vlog2.pop %v476
          %v478 = vmul.f32 %v477, 0.6931472
          %v479 = vadd.f32 %v475, %v478
          %vm480 = vcmask 7168
          %481 = vst.msk [vmem:[#allocation5] sm:$0xff] %vm480, %v479
        $region52: #{tpu_custom_call.1} parent=39 // pred_fallthru
          _
        %p482 = scmp.eq.s32.totalorder %s25, 1
        // Predicated region
        $region53: #{tpu_custom_call.1} parent=39 // pred_check
          %p483 = pneg %p482
        $region54: #{tpu_custom_call.1} parent=39 // pred_check_branch
          %485 = sbr.rel (%p483) target = $region56
        $region55: #{tpu_custom_call.1} parent=39 // pred_region
          %v486 = vld [vmem:[#allocation5] sm:$0xff]
          %488 = vset.pattern.permute.xlu0 0
          %489 = vperm.xlu0 %488, %v486
          %v490 = vpop.permute.xlu0 %489
          %v492 = vsub.f32 %v442, %v490
          %493 = vst [vmem:[%s262] sm:$0xff] %v492
        $region56: #{tpu_custom_call.1} parent=39 // pred_fallthru
          _
        %s494 = sand.u32 %s170, 1
        %s495 = scalar_lea.sflag [#allocation7], %s494
        %s496 = sand.u32 %s170, 1
        %s497 = smul.addr %s496, 8
        %s498 = scalar_lea.vmem [#allocation6], %s497
        // Predicated region
        $region57: #{tpu_custom_call.1} parent=39 // pred_check
          %p499 = pneg %p180
        $region58: #{tpu_custom_call.1} parent=39 // pred_check_branch
          %501 = sbr.rel (%p499) target = $region60
        $region59: #{tpu_custom_call.1} parent=39 // pred_region
          %s502 = smul.u32 %s26, %s25
          %s504 = ssub.s32 128, 128
          %505 = vsyncadd %s495, %s504
          %s506 = sadd.s32 %s502, %s24
          %s507 = smul.addr %s506, 128
          %s508 = scalar_lea.hbm %s5, %s507
          %s510 = sshll.u32 %s498, 4
          %s511 = int_to_ptr.vmem [resolvable:$true] %s510
          %513 = dma.vmem_to_hbm [thread:$0]  %s511, 128, %s508, %s495
        $region60: #{tpu_custom_call.1} parent=39 // pred_fallthru
          _
      $region40: #{tpu_custom_call.1} parent=5 // pred_fallthru
        _
      %p514 = scmp.le.s32.totalorder 2, %s14
      // Predicated region
      $region61: #{tpu_custom_call.1} parent=5 // pred_check
        %p515 = pneg %p514
      $region62: #{tpu_custom_call.1} parent=5 // pred_check_branch
        %517 = sbr.rel (%p515) target = $region64
      $region63: #{tpu_custom_call.1} parent=5 // pred_region
        %s518 = ssub.s32 %s14, 2
        // Predicated region
        $region65: #{tpu_custom_call.1} parent=63 // pred_check
          %p519 = pneg %p186
        $region66: #{tpu_custom_call.1} parent=63 // pred_check_branch
          %521 = sbr.rel (%p519) target = $region68
        $region67: #{tpu_custom_call.1} parent=63 // pred_region
          %s522 = sand.u32 %s171, 1
          %s523 = scalar_lea.sflag [#allocation7], %s522
          %s524 = sand.u32 %s171, 1
          %s525 = smul.addr %s524, 8
          %s526 = scalar_lea.vmem [#allocation6], %s525
          %527 = dma.done %s523, 128
        $region68: #{tpu_custom_call.1} parent=63 // pred_fallthru
          _
      $region64: #{tpu_custom_call.1} parent=5 // pred_fallthru
        _
    $region6: #{tpu_custom_call.1} parent=1 // loop_footer
      %s18 = sadd.s32 1, %s14
    $region7: #{tpu_custom_call.1} parent=1 // loop_footer_branch
      %13 = sbr.rel target = $region3
    $region8: #{tpu_custom_call.1} parent=1 // loop_exit
      _
    %528 = vsyncpa [#allocation7], 1
    %s529 = scalar_lea.sflag [#allocation7], 1
    %530 = vsyncpa %s529, 1

</llo_original>
